<compile_context>
chip_gen: v5e
topology: v5e:2x2
jax: 0.10.0
libtpu: 0.0.40
codegen_flags: <defaults>
</compile_context>

<pallas_src>
import math

import jax
import jax.numpy as jnp
from jax.experimental import pallas as pl
from jax.experimental.pallas import tpu as pltpu

BN_EPS = 1e-5
_MIB = 1024 * 1024


def sam_kernel(w_ref, b_ref, x_ref, o_ref):
    # w_ref: (2, Cin) SMEM f32   b_ref: (2,) SMEM f32
    # x_ref: (Cin, R, L) VMEM f32   o_ref: (2, R, L) VMEM f32
    cin = x_ref.shape[0]
    n_out = o_ref.shape[0]
    # f32 VPU contraction over the (tiny) channel axis.  Each input-channel
    # slab is loaded once and feeds both output channels via scalar
    # broadcast-multiply-adds (weights come from SMEM sregs).
    xc = x_ref[0]
    ys = [xc * w_ref[o, 0] for o in range(n_out)]
    for c in range(1, cin):
        xc = x_ref[c]
        for o in range(n_out):
            ys[o] = ys[o] + xc * w_ref[o, c]
    for o in range(n_out):
        y = jnp.maximum(ys[o] + b_ref[o], 0.0)   # folded BN bias + ReLU
        o_ref[o] = jax.nn.sigmoid(y)             # spatial attention weights


def _vmem_capacity_bytes():
    try:
        return int(pltpu.get_tpu_info().vmem_capacity_bytes)
    except Exception:
        return 64 * _MIB          # conservative default (v7x per-TC figure)


def _num_tensorcores():
    try:
        return max(1, int(getattr(jax.devices()[0], "num_cores", 1)))
    except Exception:
        return 1


def _pick_row_tile(nr, cin, batch, vmem_cap, n_cores):
    """Rows (of 128 lanes) per block: multiple of 8 dividing nr, or full nr."""
    if nr % 8 != 0:
        return nr                                  # full-extent block is always legal
    bytes_per_row = (cin + 2) * 128 * 4            # x rows in + out rows, f32
    budget = max(vmem_cap // 4, _MIB)              # per-block; leaves 2x-buffer headroom
    r = min(nr, max(8, (budget // bytes_per_row) // 8 * 8))
    # Multi-TC chips (v7x): ensure >=2 independent grid steps when the batch
    # alone can't provide them, but only if halved blocks stay >= ~1 MiB.
    if n_cores >= 2 and batch < 2 and r >= nr:
        half = (nr // 2) // 8 * 8
        if half >= 8 and half * bytes_per_row >= _MIB:
            r = half
    while nr % r != 0:
        r -= 8
    return max(r, 8)


def sam_pallas(x, conv_w, bn_gamma, bn_beta, bn_mean, bn_var, *, eps=BN_EPS):
    """x: (B, Cin, H, W) f32; conv_w: (2, Cin, 1, 1); bn_*: (2,). Returns (B, 2, H, W)."""
    B, Cin, H, W = x.shape
    HW = H * W

    # Fold inference-mode BatchNorm into the bias-free 1x1 conv.
    scale = bn_gamma / jnp.sqrt(bn_var + eps)                        # (2,)
    w_fused = (conv_w.reshape(2, Cin) * scale[:, None]).astype(jnp.float32)
    b_fused = (bn_beta - bn_mean * scale).astype(jnp.float32)        # (2,)

    # Lane-dense spatial layout: (B, Cin, NR, 128) when HW is 128-aligned;
    # otherwise a single full-extent spatial block (legal, just masked stores).
    if HW % 128 == 0:
        NR, L = HW // 128, 128
    else:
        NR, L = 1, HW
    x4 = x.reshape(B, Cin, NR, L).astype(jnp.float32)

    vmem_cap = _vmem_capacity_bytes()
    n_cores = _num_tensorcores()
    R = _pick_row_tile(NR, Cin, B, vmem_cap, n_cores)
    n_steps = NR // R

    blk_bytes = (Cin + 2) * R * L * 4
    vmem_limit = int(min(vmem_cap * 3 // 4, max(32 * _MIB, 3 * blk_bytes)))

    flops = 2 * B * 2 * Cin * HW                   # channel contraction
    transcendentals = B * 2 * HW                   # sigmoid exp
    bytes_accessed = (x4.size * 4 + B * 2 * HW * 4 +
                      w_fused.size * 4 + b_fused.size * 4)

    out = pl.pallas_call(
        sam_kernel,
        out_shape=jax.ShapeDtypeStruct((B, 2, NR, L), jnp.float32),
        grid=(B, n_steps),
        in_specs=[
            pl.BlockSpec(memory_space=pltpu.MemorySpace.SMEM),      # w_fused (2, Cin)
            pl.BlockSpec(memory_space=pltpu.MemorySpace.SMEM),      # b_fused (2,)
            pl.BlockSpec((pl.Squeezed(), Cin, R, L), lambda b, t: (b, 0, t, 0)),
        ],
        out_specs=pl.BlockSpec((pl.Squeezed(), 2, R, L), lambda b, t: (b, 0, t, 0)),
        compiler_params=pltpu.CompilerParams(
            dimension_semantics=("parallel", "parallel"),
            vmem_limit_bytes=vmem_limit),
        cost_estimate=pl.CostEstimate(
            flops=flops,
            transcendentals=transcendentals,
            bytes_accessed=bytes_accessed),
    )(w_fused, b_fused, x4)

    return out.reshape(B, 2, H, W)


def sam_ref(x, conv_w, bn_gamma, bn_beta, bn_mean, bn_var, *, eps=BN_EPS):
    """Pure-JAX reference mirroring the PyTorch forward (eval-mode BN)."""
    B, Cin, H, W = x.shape
    w2d = conv_w.reshape(2, Cin)
    y = jnp.einsum("oc,bchw->bohw", w2d, x)
    inv = 1.0 / jnp.sqrt(bn_var + eps)
    y = (y - bn_mean[None, :, None, None]) * inv[None, :, None, None]
    y = y * bn_gamma[None, :, None, None] + bn_beta[None, :, None, None]
    y = jnp.maximum(y, 0.0)
    return jax.nn.sigmoid(y)


if __name__ == "__main__":
    B, Cin, H, W = 2, 4, 16, 16       # inplanes = 4

    key = jax.random.PRNGKey(0)
    kx, kw, kg, kb, km, kv = jax.random.split(key, 6)
    x = jax.random.normal(kx, (B, Cin, H, W), jnp.float32)
    conv_w = jax.random.normal(kw, (2, Cin, 1, 1), jnp.float32) / math.sqrt(Cin)
    bn_gamma = 1.0 + 0.1 * jax.random.normal(kg, (2,), jnp.float32)
    bn_beta = 0.1 * jax.random.normal(kb, (2,), jnp.float32)
    bn_mean = 0.1 * jax.random.normal(km, (2,), jnp.float32)
    bn_var = jnp.abs(1.0 + 0.1 * jax.random.normal(kv, (2,), jnp.float32))

    out = sam_pallas(x, conv_w, bn_gamma, bn_beta, bn_mean, bn_var)
    jax.block_until_ready(out)

    ref = sam_ref(x, conv_w, bn_gamma, bn_beta, bn_mean, bn_var)
    assert out.shape == (B, 2, H, W)
    # Pure f32 path -> tight tolerance vs the f32 reference.
    assert jnp.allclose(out, ref, atol=1e-5, rtol=1e-5), "SAM output mismatch"

    print("KERNEL_OK")
</pallas_src>

<mosaic_0001>
module attributes {stable_mosaic.version = 11 : i64} {
  func.func @sam_kernel(%arg0: i32, %arg1: i32, %arg2: memref<2x4xf32, #tpu.memory_space<smem>>, %arg3: memref<2xf32, #tpu.memory_space<smem>>, %arg4: memref<1x4x2x128xf32, #tpu.memory_space<vmem>>, %arg5: memref<1x2x2x128xf32, #tpu.memory_space<vmem>>) attributes {dimension_semantics = [#tpu.dimension_semantics<parallel>, #tpu.dimension_semantics<parallel>], iteration_bounds = array<i64: 2, 1>, scalar_prefetch = 0 : i64, scratch_operands = 0 : i64, tpu.core_type = #tpu.core_type<tc>, window_params = [{transform_indices = @transform_0, window_bounds = array<i64: 2, 4>}, {transform_indices = @transform_1, window_bounds = array<i64: 2>}, {transform_indices = @transform_2, window_bounds = array<i64: 1, 4, 2, 128>}, {transform_indices = @transform_3, window_bounds = array<i64: 1, 2, 2, 128>}]} {
    %c0 = arith.constant 0 : index
    %c0_0 = arith.constant 0 : index
    %c0_1 = arith.constant 0 : index
    %c0_2 = arith.constant 0 : index
    %0 = vector.load %arg4[%c0, %c0_0, %c0_1, %c0_2] : memref<1x4x2x128xf32, #tpu.memory_space<vmem>>, vector<1x1x2x128xf32>
    %1 = vector.shape_cast %0 : vector<1x1x2x128xf32> to vector<2x128xf32>
    %c0_3 = arith.constant 0 : index
    %c0_4 = arith.constant 0 : index
    %2 = memref.load %arg2[%c0_3, %c0_4] : memref<2x4xf32, #tpu.memory_space<smem>>
    %3 = vector.broadcast %2 : f32 to vector<2x128xf32>
    %4 = arith.mulf %1, %3 : vector<2x128xf32>
    %c1 = arith.constant 1 : index
    %c0_5 = arith.constant 0 : index
    %5 = memref.load %arg2[%c1, %c0_5] : memref<2x4xf32, #tpu.memory_space<smem>>
    %6 = vector.broadcast %5 : f32 to vector<2x128xf32>
    %7 = arith.mulf %1, %6 : vector<2x128xf32>
    %c0_6 = arith.constant 0 : index
    %c1_7 = arith.constant 1 : index
    %c0_8 = arith.constant 0 : index
    %c0_9 = arith.constant 0 : index
    %8 = vector.load %arg4[%c0_6, %c1_7, %c0_8, %c0_9] : memref<1x4x2x128xf32, #tpu.memory_space<vmem>>, vector<1x1x2x128xf32>
    %9 = vector.shape_cast %8 : vector<1x1x2x128xf32> to vector<2x128xf32>
    %c0_10 = arith.constant 0 : index
    %c1_11 = arith.constant 1 : index
    %10 = memref.load %arg2[%c0_10, %c1_11] : memref<2x4xf32, #tpu.memory_space<smem>>
    %11 = vector.broadcast %10 : f32 to vector<2x128xf32>
    %12 = arith.mulf %9, %11 : vector<2x128xf32>
    %13 = arith.addf %4, %12 : vector<2x128xf32>
    %c1_12 = arith.constant 1 : index
    %c1_13 = arith.constant 1 : index
    %14 = memref.load %arg2[%c1_12, %c1_13] : memref<2x4xf32, #tpu.memory_space<smem>>
    %15 = vector.broadcast %14 : f32 to vector<2x128xf32>
    %16 = arith.mulf %9, %15 : vector<2x128xf32>
    %17 = arith.addf %7, %16 : vector<2x128xf32>
    %c0_14 = arith.constant 0 : index
    %c2 = arith.constant 2 : index
    %c0_15 = arith.constant 0 : index
    %c0_16 = arith.constant 0 : index
    %18 = vector.load %arg4[%c0_14, %c2, %c0_15, %c0_16] : memref<1x4x2x128xf32, #tpu.memory_space<vmem>>, vector<1x1x2x128xf32>
    %19 = vector.shape_cast %18 : vector<1x1x2x128xf32> to vector<2x128xf32>
    %c0_17 = arith.constant 0 : index
    %c2_18 = arith.constant 2 : index
    %20 = memref.load %arg2[%c0_17, %c2_18] : memref<2x4xf32, #tpu.memory_space<smem>>
    %21 = vector.broadcast %20 : f32 to vector<2x128xf32>
    %22 = arith.mulf %19, %21 : vector<2x128xf32>
    %23 = arith.addf %13, %22 : vector<2x128xf32>
    %c1_19 = arith.constant 1 : index
    %c2_20 = arith.constant 2 : index
    %24 = memref.load %arg2[%c1_19, %c2_20] : memref<2x4xf32, #tpu.memory_space<smem>>
    %25 = vector.broadcast %24 : f32 to vector<2x128xf32>
    %26 = arith.mulf %19, %25 : vector<2x128xf32>
    %27 = arith.addf %17, %26 : vector<2x128xf32>
    %c0_21 = arith.constant 0 : index
    %c3 = arith.constant 3 : index
    %c0_22 = arith.constant 0 : index
    %c0_23 = arith.constant 0 : index
    %28 = vector.load %arg4[%c0_21, %c3, %c0_22, %c0_23] : memref<1x4x2x128xf32, #tpu.memory_space<vmem>>, vector<1x1x2x128xf32>
    %29 = vector.shape_cast %28 : vector<1x1x2x128xf32> to vector<2x128xf32>
    %c0_24 = arith.constant 0 : index
    %c3_25 = arith.constant 3 : index
    %30 = memref.load %arg2[%c0_24, %c3_25] : memref<2x4xf32, #tpu.memory_space<smem>>
    %31 = vector.broadcast %30 : f32 to vector<2x128xf32>
    %32 = arith.mulf %29, %31 : vector<2x128xf32>
    %33 = arith.addf %23, %32 : vector<2x128xf32>
    %c1_26 = arith.constant 1 : index
    %c3_27 = arith.constant 3 : index
    %34 = memref.load %arg2[%c1_26, %c3_27] : memref<2x4xf32, #tpu.memory_space<smem>>
    %35 = vector.broadcast %34 : f32 to vector<2x128xf32>
    %36 = arith.mulf %29, %35 : vector<2x128xf32>
    %37 = arith.addf %27, %36 : vector<2x128xf32>
    %c0_28 = arith.constant 0 : index
    %38 = memref.load %arg3[%c0_28] : memref<2xf32, #tpu.memory_space<smem>>
    %39 = vector.broadcast %38 : f32 to vector<2x128xf32>
    %40 = arith.addf %33, %39 : vector<2x128xf32>
    %cst = arith.constant 0.000000e+00 : f32
    %41 = vector.broadcast %cst : f32 to vector<2x128xf32>
    %42 = arith.maximumf %40, %41 : vector<2x128xf32>
    %43 = arith.negf %42 : vector<2x128xf32>
    %44 = math.exp %43 : vector<2x128xf32>
    %cst_29 = arith.constant 1.000000e+00 : f32
    %45 = vector.broadcast %cst_29 : f32 to vector<2x128xf32>
    %46 = arith.addf %45, %44 : vector<2x128xf32>
    %47 = arith.divf %45, %46 : vector<2x128xf32>
    %c0_30 = arith.constant 0 : index
    %c0_31 = arith.constant 0 : index
    %c0_32 = arith.constant 0 : index
    %c0_33 = arith.constant 0 : index
    %48 = vector.load %arg5[%c0_30, %c0_31, %c0_32, %c0_33] : memref<1x2x2x128xf32, #tpu.memory_space<vmem>>, vector<1x1x2x128xf32>
    %49 = vector.shape_cast %48 : vector<1x1x2x128xf32> to vector<2x128xf32>
    %50 = vector.shape_cast %47 : vector<2x128xf32> to vector<1x1x2x128xf32>
    tpu.vector_store %arg5[%c0_30, %c0_31, %c0_32, %c0_33], %50 {strides = array<i32>} : memref<1x2x2x128xf32, #tpu.memory_space<vmem>>, vector<1x1x2x128xf32>,
    %c1_34 = arith.constant 1 : index
    %51 = memref.load %arg3[%c1_34] : memref<2xf32, #tpu.memory_space<smem>>
    %52 = vector.broadcast %51 : f32 to vector<2x128xf32>
    %53 = arith.addf %37, %52 : vector<2x128xf32>
    %cst_35 = arith.constant 0.000000e+00 : f32
    %54 = vector.broadcast %cst_35 : f32 to vector<2x128xf32>
    %55 = arith.maximumf %53, %54 : vector<2x128xf32>
    %56 = arith.negf %55 : vector<2x128xf32>
    %57 = math.exp %56 : vector<2x128xf32>
    %cst_36 = arith.constant 1.000000e+00 : f32
    %58 = vector.broadcast %cst_36 : f32 to vector<2x128xf32>
    %59 = arith.addf %58, %57 : vector<2x128xf32>
    %60 = arith.divf %58, %59 : vector<2x128xf32>
    %c0_37 = arith.constant 0 : index
    %c1_38 = arith.constant 1 : index
    %c0_39 = arith.constant 0 : index
    %c0_40 = arith.constant 0 : index
    %61 = vector.load %arg5[%c0_37, %c1_38, %c0_39, %c0_40] : memref<1x2x2x128xf32, #tpu.memory_space<vmem>>, vector<1x1x2x128xf32>
    %62 = vector.shape_cast %61 : vector<1x1x2x128xf32> to vector<2x128xf32>
    %63 = vector.shape_cast %60 : vector<2x128xf32> to vector<1x1x2x128xf32>
    tpu.vector_store %arg5[%c0_37, %c1_38, %c0_39, %c0_40], %63 {strides = array<i32>} : memref<1x2x2x128xf32, #tpu.memory_space<vmem>>, vector<1x1x2x128xf32>,
    return
  }
  func.func @transform_0(%arg0: i32, %arg1: i32) -> (i32, i32) {
    %c0_i32 = arith.constant 0 : i32
    %c0_i32_0 = arith.constant 0 : i32
    %c0_i32_1 = arith.constant 0 : i32
    return %c0_i32, %c0_i32_0 : i32, i32
  }
  func.func @transform_1(%arg0: i32, %arg1: i32) -> i32 {
    %c0_i32 = arith.constant 0 : i32
    %c0_i32_0 = arith.constant 0 : i32
    return %c0_i32 : i32
  }
  func.func @transform_2(%arg0: i32, %arg1: i32) -> (i32, i32, i32, i32) {
    %c0_i32 = arith.constant 0 : i32
    %c0_i32_0 = arith.constant 0 : i32
    %c0_i32_1 = arith.constant 0 : i32
    return %arg0, %c0_i32, %arg1, %c0_i32_0 : i32, i32, i32, i32
  }
  func.func @transform_3(%arg0: i32, %arg1: i32) -> (i32, i32, i32, i32) {
    %c0_i32 = arith.constant 0 : i32
    %c0_i32_0 = arith.constant 0 : i32
    %c0_i32_1 = arith.constant 0 : i32
    return %arg0, %c0_i32, %arg1, %c0_i32_0 : i32, i32, i32, i32
  }
}

</mosaic_0001>

<llo_original>
// kernel: tpu_custom_call.1
$region0: #{tpu_custom_call.1}
  #allocation0 [shape = 'u32[]', space=smem, size = 0x4, offset = 0x4, fixed_abs, tag = 'smem constant byte address 0x4 - core index']
  #allocation1 [shape = 'u32[72,128]{1,0:T(1,128)}', space=vmem, size = 0x9000, scoped, tag = 'internal scratch']
  %s0 = inlined_call_operand.hbm [shape: f32[2,4], index: 0, kind: input, shape index: {}]
  %s1 = inlined_call_operand.hbm [shape: f32[2], index: 1, kind: input, shape index: {}]
  %s2 = inlined_call_operand.hbm [shape: f32[2,4,2,128], index: 2, kind: input, shape index: {}]
  %s3 = inlined_call_operand.hbm [shape: f32[2,2,2,128], index: 3, kind: output, shape index: {}]
  %s4 = sld [smem:[#allocation0]]
  $region57: #{tpu_custom_call.1} parent=0
    _
  %s6 = ssub.s32 1, %s4
  %s7 = scalar_select 0, %s6, %s4
  $region1: #{tpu_custom_call.1} parent=0
    #allocation2 [shape = 'u8[1024]{0}', space=smem, size = 0x400, scoped, tag = 'input window, operand 0, single buffered']
    #allocation3 [shape = 's32[2]{0}', space=sflag, size = 0x8, scoped, tag = 'scoped memory for tpu_custom_call.1']
    #allocation4 [shape = 's32[2]{0}', space=sflag, size = 0x8, scoped, tag = 'scoped memory for tpu_custom_call.1']
    #allocation5 [shape = 's32[2]{0}', space=sflag, size = 0x8, scoped, tag = 'scoped memory for tpu_custom_call.1']
    #allocation6 [shape = 'u8[512]{0}', space=smem, size = 0x200, scoped, tag = 'input window, operand 1, single buffered']
    #allocation7 [shape = 's32[1]{0}', space=sflag, size = 0x4, scoped, tag = 'scoped memory for tpu_custom_call.1']
    #allocation8 [shape = 'u8[8192]{0}', space=vmem, size = 0x2000, scoped, tag = 'input window, operand 2']
    #allocation9 [shape = 'u8[4096]{0}', space=vmem, size = 0x1000, scoped, tag = 'output window, operand 0']
    %8 = vsyncpa [#allocation5], 0
    %9 = vsyncpa [#allocation7], 0
    %10 = vsyncpa [#allocation3], 0
    %s11 = scalar_lea.sflag [#allocation3], 1
    %12 = vsyncpa %s11, 0
    %13 = vsyncpa [#allocation4], 0
    %s14 = scalar_lea.sflag [#allocation4], 1
    %15 = vsyncpa %s14, 0
    loop: start=0, step=1, limit=4
    $region2: #{tpu_custom_call.1} parent=1 // loop_pre_header
      _
    $region3: #{tpu_custom_call.1} parent=1 // loop_header
      %s17 = sphi 0, %s21
      %p18 = scmp.ge.s32.totalorder %s17, 4
      %s24 = sphi 0, %s36
      %s25 = sphi 0, %s32
      %s26 = sphi 0, %s24
      %s27 = sphi 0, %s25
      %s28 = sphi 0, %s26
      %s29 = sphi 0, %s27
      %s37 = sphi 0, %s37
      %s39 = sphi 0, %s37
      %s40 = sphi 0, %s39
      %s54 = sphi 0, %s40
      %s58 = sphi 0, %s58
      %s60 = sphi 0, %s58
      %s61 = sphi 0, %s60
      %s75 = sphi 0, %s61
      %s83 = sphi 0, %s85
      %s86 = sphi 0, %s83
      %s87 = sphi 0, %s86
      %s103 = sphi 0, %s87
      %s111 = sphi 0, %s113
      %s114 = sphi 0, %s111
      %s115 = sphi 0, %s114
      %s131 = sphi 0, %s115
    $region4: #{tpu_custom_call.1} parent=1 // loop_header_branch
      %20 = sbr.rel (%p18) target = $region8
    $region5: #{tpu_custom_call.1} parent=1 // loop_body
      %s22 = ssub.s32 %s17, 1
      %s23 = ssub.s32 %s17, 2
      %s30 = sadd.s32 1, %s25
      %p31 = scmp.ge.s32.totalorder %s30, 1
      %s32 = scalar_select %p31, 0, %s30
      %s33 = sadd.s32 1, %s24
      %s34 = scalar_select %p31, %s33, %s24
      %p35 = scmp.ge.s32.totalorder %s34, 2
      %s36 = scalar_select %p35, 0, %s34
      %s38 = sadd.s32 %s37, 1
      %p41 = scmp.eq.s32.totalorder %s17, 1
      %p42 = scmp.ne.s32.totalorder %s37, %s39
      %p43 = scmp.eq.s32.totalorder %s17, 0
      %p44 = por %p42, %p43
      %p45 = scmp.ne.s32.totalorder %s37, %s39
      %p46 = scmp.eq.s32.totalorder %s22, 1
      %p47 = por %p45, %p46
      %p48 = scmp.ne.s32.totalorder %s39, %s40
      %p49 = scmp.eq.s32.totalorder %s22, 0
      %p50 = por %p48, %p49
      %p51 = scmp.ne.s32.totalorder %s39, %s40
      %p52 = scmp.eq.s32.totalorder %s23, 1
      %p53 = por %p51, %p52
      %p55 = scmp.ne.s32.totalorder %s40, %s54
      %p56 = scmp.eq.s32.totalorder %s23, 0
      %p57 = por %p55, %p56
      %s59 = sadd.s32 %s58, 1
      %p62 = scmp.eq.s32.totalorder %s17, 1
      %p63 = scmp.ne.s32.totalorder %s58, %s60
      %p64 = scmp.eq.s32.totalorder %s17, 0
      %p65 = por %p63, %p64
      %p66 = scmp.ne.s32.totalorder %s58, %s60
      %p67 = scmp.eq.s32.totalorder %s22, 1
      %p68 = por %p66, %p67
      %p69 = scmp.ne.s32.totalorder %s60, %s61
      %p70 = scmp.eq.s32.totalorder %s22, 0
      %p71 = por %p69, %p70
      %p72 = scmp.ne.s32.totalorder %s60, %s61
      %p73 = scmp.eq.s32.totalorder %s23, 1
      %p74 = por %p72, %p73
      %p76 = scmp.ne.s32.totalorder %s61, %s75
      %p77 = scmp.eq.s32.totalorder %s23, 0
      %p78 = por %p76, %p77
      %s79 = ssub.s32 %s24, %s36
      %s80 = ssub.s32 %s25, %s32
      %s81 = sor.u32 %s79, %s80
      %p82 = scmp.eq.s32.totalorder %s81, 0
      %s84 = sadd.s32 %s83, 1
      %s85 = scalar_select %p82, %s83, %s84
      %p88 = pneg %p82
      %p89 = scmp.eq.s32.totalorder %s17, 1
      %p90 = por %p88, %p89
      %p91 = scmp.ne.s32.totalorder %s83, %s86
      %p92 = scmp.eq.s32.totalorder %s17, 0
      %p93 = por %p91, %p92
      %p94 = scmp.ne.s32.totalorder %s83, %s86
      %p95 = scmp.eq.s32.totalorder %s22, 1
      %p96 = por %p94, %p95
      %p97 = scmp.ne.s32.totalorder %s86, %s87
      %p98 = scmp.eq.s32.totalorder %s22, 0
      %p99 = por %p97, %p98
      %p100 = scmp.ne.s32.totalorder %s86, %s87
      %p101 = scmp.eq.s32.totalorder %s23, 1
      %p102 = por %p100, %p101
      %p104 = scmp.ne.s32.totalorder %s87, %s103
      %p105 = scmp.eq.s32.totalorder %s23, 0
      %p106 = por %p104, %p105
      %s107 = ssub.s32 %s24, %s36
      %s108 = ssub.s32 %s25, %s32
      %s109 = sor.u32 %s107, %s108
      %p110 = scmp.eq.s32.totalorder %s109, 0
      %s112 = sadd.s32 %s111, 1
      %s113 = scalar_select %p110, %s111, %s112
      %p116 = pneg %p110
      %p117 = scmp.eq.s32.totalorder %s17, 1
      %p118 = por %p116, %p117
      %p119 = scmp.ne.s32.totalorder %s111, %s114
      %p120 = scmp.eq.s32.totalorder %s17, 0
      %p121 = por %p119, %p120
      %p122 = scmp.ne.s32.totalorder %s111, %s114
      %p123 = scmp.eq.s32.totalorder %s22, 1
      %p124 = por %p122, %p123
      %p125 = scmp.ne.s32.totalorder %s114, %s115
      %p126 = scmp.eq.s32.totalorder %s22, 0
      %p127 = por %p125, %p126
      %p128 = scmp.ne.s32.totalorder %s114, %s115
      %p129 = scmp.eq.s32.totalorder %s23, 1
      %p130 = por %p128, %p129
      %p132 = scmp.ne.s32.totalorder %s115, %s131
      %p133 = scmp.eq.s32.totalorder %s23, 0
      %p134 = por %p132, %p133
      %p135 = scmp.le.s32.totalorder 1, %s17
      %p136 = scmp.lt.s32.totalorder %s17, 3
      %p137 = pnand %p135, %p136
      %p138 = pneg %p137
      // Predicated region
      $region9: #{tpu_custom_call.1} parent=5 // pred_check
        _
      $region10: #{tpu_custom_call.1} parent=5 // pred_check_branch
        %140 = sbr.rel (%p137) target = $region12
      $region11: #{tpu_custom_call.1} parent=5 // pred_region
        %s141 = ssub.s32 %s17, 1
        // Predicated region
        $region13: #{tpu_custom_call.1} parent=11 // pred_check
          %p142 = pneg %p50
        $region14: #{tpu_custom_call.1} parent=11 // pred_check_branch
          %144 = sbr.rel (%p142) target = $region16
        $region15: #{tpu_custom_call.1} parent=11 // pred_region
          %146 = vsyncadd [#allocation5], 0
          %s148 = sshll.u32 %s0, 4
          %s149 = int_to_ptr.hbm [resolvable:$true] %s148
          %151 = dma.hbm_to_smem %s149, 32, [#allocation2], [#allocation5]
        $region16: #{tpu_custom_call.1} parent=11 // pred_fallthru
          _
        // Predicated region
        $region17: #{tpu_custom_call.1} parent=11 // pred_check
          %p152 = pneg %p71
        $region18: #{tpu_custom_call.1} parent=11 // pred_check_branch
          %154 = sbr.rel (%p152) target = $region20
        $region19: #{tpu_custom_call.1} parent=11 // pred_region
          %156 = vsyncadd [#allocation7], 0
          %s158 = sshll.u32 %s1, 4
          %s159 = int_to_ptr.hbm [resolvable:$true] %s158
          %161 = dma.hbm_to_smem %s159, 16, [#allocation6], [#allocation7]
        $region20: #{tpu_custom_call.1} parent=11 // pred_fallthru
          _
      $region12: #{tpu_custom_call.1} parent=5 // pred_fallthru
        _
      %p162 = scmp.lt.s32.totalorder %s17, 2
      // Predicated region
      $region21: #{tpu_custom_call.1} parent=5 // pred_check
        %p163 = pneg %p162
      $region22: #{tpu_custom_call.1} parent=5 // pred_check_branch
        %165 = sbr.rel (%p163) target = $region24
      $region23: #{tpu_custom_call.1} parent=5 // pred_region
        // Predicated region
        $region25: #{tpu_custom_call.1} parent=23 // pred_check
          %p166 = pneg %p93
        $region26: #{tpu_custom_call.1} parent=23 // pred_check_branch
          %168 = sbr.rel (%p166) target = $region28
        $region27: #{tpu_custom_call.1} parent=23 // pred_region
          %s169 = sand.u32 %s83, 1
          %s170 = scalar_lea.sflag [#allocation3], %s169
          %s171 = sand.u32 %s83, 1
          %s172 = smul.addr %s171, 8
          %s173 = scalar_lea.vmem [#allocation8], %s172
          %175 = vsyncadd %s170, 0
          %s176 = smul.addr %s24, 4
          %s177 = sadd.s32 %s25, %s176
          %s178 = smul.addr %s177, 2
          %s179 = scalar_lea.hbm %s2, %s178
          %s180 = sshll.u32 %s179, 4
          %s181 = int_to_ptr.hbm [resolvable:$true] %s180
          %s182 = sshll.u32 %s173, 4
          %s183 = int_to_ptr.vmem [resolvable:$true] %s182
          %188 = dma.hbm_to_vmem [thread:$0]  %s181, 128, %s183, %s170, 32, 32, 2
        $region28: #{tpu_custom_call.1} parent=23 // pred_fallthru
          _
      $region24: #{tpu_custom_call.1} parent=5 // pred_fallthru
        _
      %p189 = scmp.le.s32.totalorder 1, %s17
      %p190 = scmp.lt.s32.totalorder %s17, 3
      %p191 = pnand %p189, %p190
      %p192 = pneg %p191
      // Predicated region
      $region29: #{tpu_custom_call.1} parent=5 // pred_check
        _
      $region30: #{tpu_custom_call.1} parent=5 // pred_check_branch
        %194 = sbr.rel (%p191) target = $region32
      $region31: #{tpu_custom_call.1} parent=5 // pred_region
        %s195 = ssub.s32 %s17, 1
        // Predicated region
        $region33: #{tpu_custom_call.1} parent=31 // pred_check
          %p196 = pneg %p50
        $region34: #{tpu_custom_call.1} parent=31 // pred_check_branch
          %198 = sbr.rel (%p196) target = $region36
        $region35: #{tpu_custom_call.1} parent=31 // pred_region
          %200 = dma.done [#allocation5], 32
        $region36: #{tpu_custom_call.1} parent=31 // pred_fallthru
          _
        // Predicated region
        $region37: #{tpu_custom_call.1} parent=31 // pred_check
          %p201 = pneg %p71
        $region38: #{tpu_custom_call.1} parent=31 // pred_check_branch
          %203 = sbr.rel (%p201) target = $region40
        $region39: #{tpu_custom_call.1} parent=31 // pred_region
          %205 = dma.done [#allocation7], 16
        $region40: #{tpu_custom_call.1} parent=31 // pred_fallthru
          _
        %s206 = sand.u32 %s86, 1
        %s207 = scalar_lea.sflag [#allocation3], %s206
        %s208 = sand.u32 %s86, 1
        %s209 = smul.addr %s208, 8
        %s210 = scalar_lea.vmem [#allocation8], %s209
        // Predicated region
        $region41: #{tpu_custom_call.1} parent=31 // pred_check
          %p211 = pneg %p99
        $region42: #{tpu_custom_call.1} parent=31 // pred_check_branch
          %213 = sbr.rel (%p211) target = $region44
        $region43: #{tpu_custom_call.1} parent=31 // pred_region
          %215 = dma.done %s207, 128
        $region44: #{tpu_custom_call.1} parent=31 // pred_fallthru
          _
        %216 = sfence
        %p217 = pneg %p50
        %p218 = pneg %p47
        %p219 = pneg %p71
        %p220 = pneg %p68
        %s221 = sand.u32 %s86, 1
        %s222 = scalar_lea.sflag [#allocation3], %s221
        %s223 = sand.u32 %s86, 1
        %s224 = smul.addr %s223, 8
        %s225 = scalar_lea.vmem [#allocation8], %s224
        %p226 = pneg %p99
        %p227 = pneg %p96
        %p228 = pneg %p127
        %p229 = pneg %p124
        %s230 = sand.u32 %s114, 1
        %s231 = scalar_lea.sflag [#allocation4], %s230
        %s232 = sand.u32 %s114, 1
        %s233 = smul.addr %s232, 4
        %s234 = scalar_lea.vmem [#allocation9], %s233
        %v235 = vld [vmem:[%s210] sm:$0x3]
        %s236 = sld [smem:[#allocation2]]
        %v237 = vstv %s236
        %v238 = vmul.f32 %v235, %v237
        %s239 = sld [smem:[#allocation2 + $0x80]]
        %v240 = vstv %s239
        %v241 = vmul.f32 %v235, %v240
        %s242 = scalar_lea.vmem %s210, 2 [#allocation8]
        %v243 = vld [vmem:[%s242] sm:$0x3]
        %s244 = sld [smem:[#allocation2 + $0x1]]
        %v245 = vstv %s244
        %v246 = vmul.f32 %v243, %v245
        %v247 = vadd.f32 %v238, %v246
        %s248 = sld [smem:[#allocation2 + $0x81]]
        %v249 = vstv %s248
        %v250 = vmul.f32 %v243, %v249
        %v251 = vadd.f32 %v241, %v250
        %s252 = scalar_lea.vmem %s210, 4 [#allocation8]
        %v253 = vld [vmem:[%s252] sm:$0x3]
        %s254 = sld [smem:[#allocation2 + $0x2]]
        %v255 = vstv %s254
        %v256 = vmul.f32 %v253, %v255
        %v257 = vadd.f32 %v247, %v256
        %s258 = sld [smem:[#allocation2 + $0x82]]
        %v259 = vstv %s258
        %v260 = vmul.f32 %v253, %v259
        %v261 = vadd.f32 %v251, %v260
        %s262 = scalar_lea.vmem %s210, 6 [#allocation8]
        %v263 = vld [vmem:[%s262] sm:$0x3]
        %s264 = sld [smem:[#allocation2 + $0x3]]
        %v265 = vstv %s264
        %v266 = vmul.f32 %v263, %v265
        %v267 = vadd.f32 %v257, %v266
        %s268 = sld [smem:[#allocation2 + $0x83]]
        %v269 = vstv %s268
        %v270 = vmul.f32 %v263, %v269
        %v271 = vadd.f32 %v261, %v270
        %s272 = sld [smem:[#allocation6]]
        %v273 = vstv %s272
        %v274 = vadd.f32 %v267, %v273
        %v275 = vmax.f32 %v274, 0.0
        %v276 = vxor.u32 %v275, 2147483648
        %v277 = vmul.f32 %v276, 1.442695
        %v278 = vpow.pop %v277
        %v279 = vadd.f32 %v278, 1.0
        %v280 = vrcp.pop %v279
        %v281 = vmul.f32 %v279, %v280
        %v282 = vsub.f32 1.0, %v281
        %v283 = vmul.f32 %v280, %v282
        %v284 = vadd.f32 %v280, %v283
        %vm285 = vweird.f32 %v279
        %vm286 = vweird.f32 %v280
        %vm287 = vmor %vm285, %vm286
        %v288 = vsel %vm287, %v280, %v284
        %v289 = vand.u32 2147483647, %v279
        %vm290 = vcmp.eq.f32.partialorder %v289, 8.507059e+37
        %v291 = vand.u32 %v279, 2147483648
        %v292 = vor.u32 1.1754944e-38, %v291
        %v293 = vsel %vm290, %v292, %v288
        %v294 = vmul.f32 1.0, %v293
        %295 = vst [vmem:[%s234] sm:$0x3] %v294
        %s296 = sld [smem:[#allocation6 + $0x1]]
        %v297 = vstv %s296
        %v298 = vadd.f32 %v271, %v297
        %v299 = vmax.f32 %v298, 0.0
        %v300 = vxor.u32 %v299, 2147483648
        %v301 = vmul.f32 %v300, 1.442695
        %v302 = vpow.pop %v301
        %v303 = vadd.f32 %v302, 1.0
        %v304 = vrcp.pop %v303
        %v305 = vmul.f32 %v303, %v304
        %v306 = vsub.f32 1.0, %v305
        %v307 = vmul.f32 %v304, %v306
        %v308 = vadd.f32 %v304, %v307
        %vm309 = vweird.f32 %v303
        %vm310 = vweird.f32 %v304
        %vm311 = vmor %vm309, %vm310
        %v312 = vsel %vm311, %v304, %v308
        %v313 = vand.u32 2147483647, %v303
        %vm314 = vcmp.eq.f32.partialorder %v313, 8.507059e+37
        %v315 = vand.u32 %v303, 2147483648
        %v316 = vor.u32 1.1754944e-38, %v315
        %v317 = vsel %vm314, %v316, %v312
        %v318 = vmul.f32 1.0, %v317
        %s319 = scalar_lea.vmem %s234, 2 [#allocation9]
        %320 = vst [vmem:[%s319] sm:$0x3] %v318
        %s321 = sand.u32 %s114, 1
        %s322 = scalar_lea.sflag [#allocation4], %s321
        %s323 = sand.u32 %s114, 1
        %s324 = smul.addr %s323, 4
        %s325 = scalar_lea.vmem [#allocation9], %s324
        // Predicated region
        $region45: #{tpu_custom_call.1} parent=31 // pred_check
          %p326 = pneg %p124
        $region46: #{tpu_custom_call.1} parent=31 // pred_check_branch
          %328 = sbr.rel (%p326) target = $region48
        $region47: #{tpu_custom_call.1} parent=31 // pred_region
          %330 = vsyncadd %s322, 0
          %s331 = smul.addr %s26, 2
          %s332 = sadd.s32 %s27, %s331
          %s333 = smul.addr %s332, 2
          %s334 = scalar_lea.hbm %s3, %s333
          %s335 = sshll.u32 %s325, 4
          %s336 = int_to_ptr.vmem [resolvable:$true] %s335
          %s337 = sshll.u32 %s334, 4
          %s338 = int_to_ptr.hbm [resolvable:$true] %s337
          %343 = dma.vmem_to_hbm [thread:$0]  %s336, 64, %s338, %s322, 32, 32, 2
        $region48: #{tpu_custom_call.1} parent=31 // pred_fallthru
          _
      $region32: #{tpu_custom_call.1} parent=5 // pred_fallthru
        _
      %p344 = scmp.le.s32.totalorder 2, %s17
      // Predicated region
      $region49: #{tpu_custom_call.1} parent=5 // pred_check
        %p345 = pneg %p344
      $region50: #{tpu_custom_call.1} parent=5 // pred_check_branch
        %347 = sbr.rel (%p345) target = $region52
      $region51: #{tpu_custom_call.1} parent=5 // pred_region
        %s348 = ssub.s32 %s17, 2
        // Predicated region
        $region53: #{tpu_custom_call.1} parent=51 // pred_check
          %p349 = pneg %p130
        $region54: #{tpu_custom_call.1} parent=51 // pred_check_branch
          %351 = sbr.rel (%p349) target = $region56
        $region55: #{tpu_custom_call.1} parent=51 // pred_region
          %s352 = sand.u32 %s115, 1
          %s353 = scalar_lea.sflag [#allocation4], %s352
          %s354 = sand.u32 %s115, 1
          %s355 = smul.addr %s354, 4
          %s356 = scalar_lea.vmem [#allocation9], %s355
          %358 = dma.done %s353, 64
        $region56: #{tpu_custom_call.1} parent=51 // pred_fallthru
          _
      $region52: #{tpu_custom_call.1} parent=5 // pred_fallthru
        _
    $region6: #{tpu_custom_call.1} parent=1 // loop_footer
      %s21 = sadd.s32 1, %s17
    $region7: #{tpu_custom_call.1} parent=1 // loop_footer_branch
      %16 = sbr.rel target = $region3
    $region8: #{tpu_custom_call.1} parent=1 // loop_exit
      _
    %359 = vsyncpa [#allocation3], 1
    %s360 = scalar_lea.sflag [#allocation3], 1
    %361 = vsyncpa %s360, 1
    %362 = vsyncpa [#allocation4], 1
    %s363 = scalar_lea.sflag [#allocation4], 1
    %364 = vsyncpa %s363, 1
    %365 = vsyncpa [#allocation5], 1
    %s366 = scalar_lea.sflag [#allocation5], 1
    %367 = vsyncpa %s366, 1
    %368 = vsyncpa [#allocation7], 1

</llo_original>
